<compile_context>
chip_gen: v7x
topology: tpu7x:2x2x1
jax: 0.10.0
libtpu: 0.0.40
codegen_flags: <defaults>
</compile_context>

<pallas_src>
import jax
import jax.numpy as jnp
from jax.experimental import pallas as pl
from jax.experimental.pallas import tpu as pltpu


def prototype_mean_kernel(x_ref, o_ref):
    """x_ref: (N, H) in VMEM, o_ref: (1, H) in VMEM.  o = mean(x, axis=0)."""
    n = x_ref.shape[0]
    x = x_ref[...].astype(jnp.float32)
    # Sublane reduction + single scalar multiply (1/N is a constant).
    s = jnp.sum(x, axis=0, keepdims=True)            # (1, H), f32
    o_ref[...] = (s * jnp.float32(1.0 / n)).astype(o_ref.dtype)


def prototype_forward(x):
    """x: (N, H) -> (H,)  == torch.mean(x, dim=0)."""
    n, h = x.shape
    out2d = pl.pallas_call(
        prototype_mean_kernel,
        out_shape=jax.ShapeDtypeStruct((1, h), x.dtype),
        # Whole arrays as single VMEM blocks; no grid -> no pipeline overhead.
        in_specs=[pl.BlockSpec(memory_space=pltpu.MemorySpace.VMEM)],
        out_specs=pl.BlockSpec(memory_space=pltpu.MemorySpace.VMEM),
    )(x)
    return out2d.reshape(h)


def prototype_reference(x):
    """Pure-JAX reference mirroring torch.mean(x, dim=0)."""
    return jnp.mean(x, axis=0)


if __name__ == "__main__":
    # DPGNN uses args.n_hidden = 32; a per-class node group of 16 embeddings.
    n_nodes = 16
    n_hidden = 32

    key = jax.random.PRNGKey(0)
    x = jax.random.normal(key, (n_nodes, n_hidden), dtype=jnp.float32)

    out = prototype_forward(x)
    out = jax.block_until_ready(out)

    ref = prototype_reference(x)
    assert out.shape == (n_hidden,)
    assert jnp.allclose(out, ref, atol=1e-5, rtol=1e-5), "mismatch vs reference"

    print("KERNEL_OK")
</pallas_src>

<mosaic_0001>
module attributes {stable_mosaic.version = 11 : i64} {
  func.func @prototype_mean_kernel(%arg0: memref<16x32xf32, #tpu.memory_space<vmem>>, %arg1: memref<1x32xf32, #tpu.memory_space<vmem>>) attributes {dimension_semantics = [], scalar_prefetch = 0 : i64, scratch_operands = 0 : i64, tpu.core_type = #tpu.core_type<tc>} {
    %c0 = arith.constant 0 : index
    %c0_0 = arith.constant 0 : index
    %0 = vector.load %arg0[%c0, %c0_0] : memref<16x32xf32, #tpu.memory_space<vmem>>, vector<16x32xf32>
    %cst = arith.constant dense<0.000000e+00> : vector<32xf32>
    %1 = vector.multi_reduction <add>, %0, %cst [0] : vector<16x32xf32> to vector<32xf32>
    %2 = vector.shape_cast %1 : vector<32xf32> to vector<1x32xf32>
    %cst_1 = arith.constant 6.250000e-02 : f32
    %3 = vector.broadcast %cst_1 : f32 to vector<1x32xf32>
    %4 = arith.mulf %2, %3 : vector<1x32xf32>
    %c0_2 = arith.constant 0 : index
    %c0_3 = arith.constant 0 : index
    %5 = vector.load %arg1[%c0_2, %c0_3] : memref<1x32xf32, #tpu.memory_space<vmem>>, vector<1x32xf32>
    tpu.vector_store %arg1[%c0_2, %c0_3], %4 {strides = array<i32>} : memref<1x32xf32, #tpu.memory_space<vmem>>, vector<1x32xf32>,
    return
  }
}

</mosaic_0001>

<llo_original>
// kernel: tpu_custom_call.1
$region0: #{tpu_custom_call.1}
  #allocation0 [shape = 'u32[]', space=smem, size = 0x4, offset = 0x4, fixed_abs, tag = 'smem constant byte address 0x4 - core index']
  #allocation1 [shape = 'u32[144,128]{1,0:T(1,128)}', space=vmem, size = 0x12000, scoped, tag = 'internal scratch']
  %s0 = inlined_call_operand.hbm [shape: f32[16,32], index: 0, kind: input, shape index: {}]
  %s1 = inlined_call_operand.hbm [shape: f32[1,32], index: 1, kind: output, shape index: {}]
  %s2 = sld [smem:[#allocation0]]
  $region18: #{tpu_custom_call.1} parent=0
    _
  %s4 = ssub.s32 1, %s2
  %s5 = scalar_select 0, %s4, %s2
  $region1: #{tpu_custom_call.1} parent=0
    #allocation2 [shape = 'u8[8192]{0}', space=vmem, size = 0x2000, scoped, tag = 'input window, operand 0, single buffered']
    #allocation3 [shape = 's32[1]{0}', space=sflag, size = 0x4, scoped, tag = 'scoped memory for tpu_custom_call.1']
    #allocation4 [shape = 's32[1]{0}', space=sflag, size = 0x4, scoped, tag = 'scoped memory for tpu_custom_call.1']
    #allocation5 [shape = 'u8[512]{0}', space=vmem, size = 0x400, scoped, tag = 'output window, operand 0, single buffered']
    %6 = vsyncpa [#allocation3], 0
    %7 = vsyncpa [#allocation4], 0
    // Predicated region
    $region2: #{tpu_custom_call.1} parent=1 // pred_check
      _
    $region3: #{tpu_custom_call.1} parent=1 // pred_check_branch
      %9 = sbr.rel (0) target = $region5
    $region4: #{tpu_custom_call.1} parent=1 // pred_region
      %s11 = ssub.s32 256, 256
      %12 = vsyncadd [#allocation3], %s11
      %s13 = sshll.u32 [#allocation2], 4
      %s14 = int_to_ptr.vmem [resolvable:$true] %s13
      %19 = dma.hbm_to_vmem [thread:$0]  %s0, 256, %s14, [#allocation3], 128, 128, 8
    $region5: #{tpu_custom_call.1} parent=1 // pred_fallthru
      _
    // Predicated region
    $region6: #{tpu_custom_call.1} parent=1 // pred_check
      _
    $region7: #{tpu_custom_call.1} parent=1 // pred_check_branch
      %21 = sbr.rel (0) target = $region9
    $region8: #{tpu_custom_call.1} parent=1 // pred_region
      %22 = dma.done [#allocation3], 256
    $region9: #{tpu_custom_call.1} parent=1 // pred_fallthru
      _
    %v23 = vld [vmem:[#allocation2] sm:$0xff]
    %v24 = vld [vmem:[#allocation2 + $0x8] sm:$0xff]
    %vm25 = vcmask 261120
    %v26 = vsel %vm25, %v23, 0.0
    %v27 = vsel %vm25, %v24, 0.0
    %v28 = vadd.f32 %v26, %v27
    %v29 = vrot.slane %v28, 4
    %v30 = vadd.f32 %v28, %v29
    %v31 = vrot.slane %v30, 2
    %v32 = vadd.f32 %v30, %v31
    %v33 = vrot.slane %v32, 1
    %v34 = vadd.f32 %v32, %v33
    %v35 = vmul.f32 %v34, 0.0625
    %vm36 = vcmask 253952
    %37 = vst.msk [vmem:[#allocation5] sm:$0x1] %vm36, %v35
    // Predicated region
    $region10: #{tpu_custom_call.1} parent=1 // pred_check
      _
    $region11: #{tpu_custom_call.1} parent=1 // pred_check_branch
      %39 = sbr.rel (0) target = $region13
    $region12: #{tpu_custom_call.1} parent=1 // pred_region
      %s41 = ssub.s32 16, 16
      %42 = vsyncadd [#allocation4], %s41
      %s44 = sshll.u32 [#allocation5], 4
      %s45 = int_to_ptr.vmem [resolvable:$true] %s44
      %47 = dma.vmem_to_hbm [thread:$0]  %s45, 16, %s1, [#allocation4]
    $region13: #{tpu_custom_call.1} parent=1 // pred_fallthru
      _
    // Predicated region
    $region14: #{tpu_custom_call.1} parent=1 // pred_check
      _
    $region15: #{tpu_custom_call.1} parent=1 // pred_check_branch
      %49 = sbr.rel (0) target = $region17
    $region16: #{tpu_custom_call.1} parent=1 // pred_region
      %50 = dma.done [#allocation4], 16
    $region17: #{tpu_custom_call.1} parent=1 // pred_fallthru
      _
    %51 = vsyncpa [#allocation3], 1
    %52 = vsyncpa [#allocation4], 1

</llo_original>
